<compile_context>
chip_gen: v7x
topology: tpu7x:2x2x1
jax: 0.10.0
libtpu: 0.0.40
codegen_flags: <defaults>
</compile_context>

<pallas_src>
import functools

import jax
import jax.numpy as jnp
from jax.experimental import pallas as pl
from jax.experimental.pallas import tpu as pltpu

LANE = 128
SUBLANE = 8


def _round_up(x, m):
    return (x + m - 1) // m * m


def qnet_kernel(x_ref, w1_ref, b1_ref, w2_ref, b2_ref, o_ref):
    x = x_ref[...]                      # [TM, n_in]  (n_in = 4)
    w1 = w1_ref[...]                    # [n_in, H]
    tm = x_ref.shape[0]
    n_in = x_ref.shape[1]
    hidden = w1_ref.shape[1]

    # ---- layer 1: x @ w1 + b1, ReLU — n_in (=4) VPU broadcast-FMAs ----
    h = jnp.broadcast_to(b1_ref[...], (tm, hidden)).astype(jnp.float32)
    for k in range(n_in):               # static unroll, tiny K
        h = h + x[:, k:k + 1].astype(jnp.float32) * w1[k:k + 1, :].astype(jnp.float32)
    h = jnp.maximum(h, 0.0)

    # ---- layer 2: h @ w2 + b2 on the MXU (K = 128), f32 accumulate ----
    out = jnp.dot(h.astype(w2_ref.dtype), w2_ref[...],
                  preferred_element_type=jnp.float32)
    out = out + b2_ref[...]
    o_ref[...] = out.astype(o_ref.dtype)   # lane-dense [TM, 128] store


@functools.partial(jax.jit, static_argnames=("batch_tile",))
def qnetwork_forward(x, w1, b1, w2, b2, *, batch_tile=512):
    B, n_in = x.shape
    hidden = w1.shape[1]
    n_out = w2.shape[1]
    dtype = x.dtype

    # Lane-dense output padding (exact: extra columns of w2/b2 are zero).
    n_out_p = _round_up(n_out, LANE)
    w2_p = jnp.zeros((hidden, n_out_p), w2.dtype).at[:, :n_out].set(w2)
    b2_p = jnp.zeros((1, n_out_p), b2.dtype).at[:, :n_out].set(b2.reshape(1, n_out))
    b1_p = b1.reshape(1, hidden)

    # Batch tiling: largest tile up to `batch_tile`, sublane-aligned.
    tm = min(batch_tile, _round_up(B, SUBLANE))
    B_pad = _round_up(B, tm)
    x_p = x if B_pad == B else jnp.zeros((B_pad, n_in), dtype).at[:B, :].set(x)

    grid = (B_pad // tm,)
    cost = pl.CostEstimate(
        flops=2 * B_pad * (n_in * hidden + hidden * n_out_p),
        transcendentals=0,
        bytes_accessed=(x_p.size + w1.size + b1_p.size + w2_p.size + b2_p.size
                        + B_pad * n_out_p) * jnp.dtype(dtype).itemsize,
    )

    out_p = pl.pallas_call(
        qnet_kernel,
        out_shape=jax.ShapeDtypeStruct((B_pad, n_out_p), dtype),
        grid=grid,
        in_specs=[
            pl.BlockSpec((tm, n_in), lambda i: (i, 0)),         # x batch tile
            pl.BlockSpec((n_in, hidden), lambda i: (0, 0)),     # w1 resident
            pl.BlockSpec((1, hidden), lambda i: (0, 0)),        # b1 resident
            pl.BlockSpec((hidden, n_out_p), lambda i: (0, 0)),  # w2 (padded) resident
            pl.BlockSpec((1, n_out_p), lambda i: (0, 0)),       # b2 (padded) resident
        ],
        out_specs=pl.BlockSpec((tm, n_out_p), lambda i: (i, 0)),
        compiler_params=pltpu.CompilerParams(
            dimension_semantics=("parallel",)),
        cost_estimate=cost,
    )(x_p, w1, b1_p, w2_p, b2_p)

    return out_p[:B, :n_out]


def init_params(key, n_input=4, num_hidden=128, n_output=2, dtype=jnp.float32):
    """Deterministic init mirroring nn.Linear's U(-1/sqrt(fan_in), 1/sqrt(fan_in))."""
    k1, k2, k3, k4 = jax.random.split(key, 4)
    lim1 = 1.0 / jnp.sqrt(jnp.array(n_input, dtype))
    lim2 = 1.0 / jnp.sqrt(jnp.array(num_hidden, dtype))
    w1 = jax.random.uniform(k1, (n_input, num_hidden), dtype, -lim1, lim1)
    b1 = jax.random.uniform(k2, (1, num_hidden), dtype, -lim1, lim1)
    w2 = jax.random.uniform(k3, (num_hidden, n_output), dtype, -lim2, lim2)
    b2 = jax.random.uniform(k4, (1, n_output), dtype, -lim2, lim2)
    return w1, b1, w2, b2


if __name__ == "__main__":
    key = jax.random.PRNGKey(0)
    kx, kp = jax.random.split(key)

    n_input, num_hidden, n_output = 4, 128, 2
    w1, b1, w2, b2 = init_params(kp, n_input, num_hidden, n_output)

    ok = True
    for B in (8, 37):  # aligned and unaligned batch (exercises the padding path)
        x = jax.random.normal(jax.random.fold_in(kx, B), (B, n_input), dtype=jnp.float32)
        out = qnetwork_forward(x, w1, b1, w2, b2)
        out = jax.block_until_ready(out)
        ref = jnp.maximum(x @ w1 + b1, 0.0) @ w2 + b2
        ok &= out.shape == (B, n_output)
        ok &= bool(jnp.allclose(out, ref, atol=1e-5, rtol=1e-5))

    assert ok
    print("KERNEL_OK")
</pallas_src>

<mosaic_0001>
module attributes {stable_mosaic.version = 11 : i64} {
  func.func @qnet_kernel(%arg0: i32, %arg1: memref<8x4xf32, #tpu.memory_space<vmem>>, %arg2: memref<4x128xf32, #tpu.memory_space<vmem>>, %arg3: memref<1x128xf32, #tpu.memory_space<vmem>>, %arg4: memref<128x128xf32, #tpu.memory_space<vmem>>, %arg5: memref<1x128xf32, #tpu.memory_space<vmem>>, %arg6: memref<8x128xf32, #tpu.memory_space<vmem>>) attributes {dimension_semantics = [#tpu.dimension_semantics<parallel>], iteration_bounds = array<i64: 1>, scalar_prefetch = 0 : i64, scratch_operands = 0 : i64, tpu.core_type = #tpu.core_type<tc>, window_params = [{transform_indices = @transform_0, window_bounds = array<i64: 8, 4>}, {pipeline_mode = #tpu.pipeline_mode<synchronous>, transform_indices = @transform_1, window_bounds = array<i64: 4, 128>}, {pipeline_mode = #tpu.pipeline_mode<synchronous>, transform_indices = @transform_2, window_bounds = array<i64: 1, 128>}, {pipeline_mode = #tpu.pipeline_mode<synchronous>, transform_indices = @transform_3, window_bounds = array<i64: 128, 128>}, {pipeline_mode = #tpu.pipeline_mode<synchronous>, transform_indices = @transform_4, window_bounds = array<i64: 1, 128>}, {transform_indices = @transform_5, window_bounds = array<i64: 8, 128>}]} {
    %c0 = arith.constant 0 : index
    %c0_0 = arith.constant 0 : index
    %0 = vector.load %arg1[%c0, %c0_0] : memref<8x4xf32, #tpu.memory_space<vmem>>, vector<8x4xf32>
    %c0_1 = arith.constant 0 : index
    %c0_2 = arith.constant 0 : index
    %1 = vector.load %arg2[%c0_1, %c0_2] : memref<4x128xf32, #tpu.memory_space<vmem>>, vector<4x128xf32>
    %c0_3 = arith.constant 0 : index
    %c0_4 = arith.constant 0 : index
    %2 = vector.load %arg3[%c0_3, %c0_4] : memref<1x128xf32, #tpu.memory_space<vmem>>, vector<1x128xf32>
    %3 = vector.shape_cast %2 : vector<1x128xf32> to vector<1x128xf32>
    %4 = vector.broadcast %3 : vector<1x128xf32> to vector<8x128xf32>
    %5 = vector.extract_strided_slice %0 {offsets = [0, 0], sizes = [8, 1], strides = [1, 1]} : vector<8x4xf32> to vector<8x1xf32>
    %6 = vector.extract_strided_slice %1 {offsets = [0, 0], sizes = [1, 128], strides = [1, 1]} : vector<4x128xf32> to vector<1x128xf32>
    %7 = vector.broadcast %5 : vector<8x1xf32> to vector<8x128xf32>
    %8 = vector.broadcast %6 : vector<1x128xf32> to vector<8x128xf32>
    %9 = arith.mulf %7, %8 : vector<8x128xf32>
    %10 = arith.addf %4, %9 : vector<8x128xf32>
    %11 = vector.extract_strided_slice %0 {offsets = [0, 1], sizes = [8, 1], strides = [1, 1]} : vector<8x4xf32> to vector<8x1xf32>
    %12 = vector.extract_strided_slice %1 {offsets = [1, 0], sizes = [1, 128], strides = [1, 1]} : vector<4x128xf32> to vector<1x128xf32>
    %13 = vector.broadcast %11 : vector<8x1xf32> to vector<8x128xf32>
    %14 = vector.broadcast %12 : vector<1x128xf32> to vector<8x128xf32>
    %15 = arith.mulf %13, %14 : vector<8x128xf32>
    %16 = arith.addf %10, %15 : vector<8x128xf32>
    %17 = vector.extract_strided_slice %0 {offsets = [0, 2], sizes = [8, 1], strides = [1, 1]} : vector<8x4xf32> to vector<8x1xf32>
    %18 = vector.extract_strided_slice %1 {offsets = [2, 0], sizes = [1, 128], strides = [1, 1]} : vector<4x128xf32> to vector<1x128xf32>
    %19 = vector.broadcast %17 : vector<8x1xf32> to vector<8x128xf32>
    %20 = vector.broadcast %18 : vector<1x128xf32> to vector<8x128xf32>
    %21 = arith.mulf %19, %20 : vector<8x128xf32>
    %22 = arith.addf %16, %21 : vector<8x128xf32>
    %23 = vector.extract_strided_slice %0 {offsets = [0, 3], sizes = [8, 1], strides = [1, 1]} : vector<8x4xf32> to vector<8x1xf32>
    %24 = vector.extract_strided_slice %1 {offsets = [3, 0], sizes = [1, 128], strides = [1, 1]} : vector<4x128xf32> to vector<1x128xf32>
    %25 = vector.broadcast %23 : vector<8x1xf32> to vector<8x128xf32>
    %26 = vector.broadcast %24 : vector<1x128xf32> to vector<8x128xf32>
    %27 = arith.mulf %25, %26 : vector<8x128xf32>
    %28 = arith.addf %22, %27 : vector<8x128xf32>
    %cst = arith.constant 0.000000e+00 : f32
    %29 = vector.broadcast %cst : f32 to vector<8x128xf32>
    %30 = arith.maximumf %28, %29 : vector<8x128xf32>
    %c0_5 = arith.constant 0 : index
    %c0_6 = arith.constant 0 : index
    %31 = vector.load %arg4[%c0_5, %c0_6] : memref<128x128xf32, #tpu.memory_space<vmem>>, vector<128x128xf32>
    %cst_7 = arith.constant dense<0.000000e+00> : vector<8x128xf32>
    %32 = tpu.matmul %30, %31, %cst_7 {dimension_numbers = #tpu.dot_dimension_numbers<[1], [0], [0], [1], [0, 0, 1, 1], [], []>} : vector<8x128xf32>, vector<128x128xf32>, vector<8x128xf32> -> vector<8x128xf32>
    %c0_8 = arith.constant 0 : index
    %c0_9 = arith.constant 0 : index
    %33 = vector.load %arg5[%c0_8, %c0_9] : memref<1x128xf32, #tpu.memory_space<vmem>>, vector<1x128xf32>
    %34 = vector.broadcast %33 : vector<1x128xf32> to vector<8x128xf32>
    %35 = arith.addf %32, %34 : vector<8x128xf32>
    %c0_10 = arith.constant 0 : index
    %c0_11 = arith.constant 0 : index
    %36 = vector.load %arg6[%c0_10, %c0_11] : memref<8x128xf32, #tpu.memory_space<vmem>>, vector<8x128xf32>
    tpu.vector_store %arg6[%c0_10, %c0_11], %35 {strides = array<i32>} : memref<8x128xf32, #tpu.memory_space<vmem>>, vector<8x128xf32>,
    return
  }
  func.func @transform_0(%arg0: i32) -> (i32, i32) {
    %c0_i32 = arith.constant 0 : i32
    %c0_i32_0 = arith.constant 0 : i32
    return %arg0, %c0_i32 : i32, i32
  }
  func.func @transform_1(%arg0: i32) -> (i32, i32) {
    %c0_i32 = arith.constant 0 : i32
    %c0_i32_0 = arith.constant 0 : i32
    %c0_i32_1 = arith.constant 0 : i32
    return %c0_i32, %c0_i32_0 : i32, i32
  }
  func.func @transform_2(%arg0: i32) -> (i32, i32) {
    %c0_i32 = arith.constant 0 : i32
    %c0_i32_0 = arith.constant 0 : i32
    %c0_i32_1 = arith.constant 0 : i32
    return %c0_i32, %c0_i32_0 : i32, i32
  }
  func.func @transform_3(%arg0: i32) -> (i32, i32) {
    %c0_i32 = arith.constant 0 : i32
    %c0_i32_0 = arith.constant 0 : i32
    %c0_i32_1 = arith.constant 0 : i32
    return %c0_i32, %c0_i32_0 : i32, i32
  }
  func.func @transform_4(%arg0: i32) -> (i32, i32) {
    %c0_i32 = arith.constant 0 : i32
    %c0_i32_0 = arith.constant 0 : i32
    %c0_i32_1 = arith.constant 0 : i32
    return %c0_i32, %c0_i32_0 : i32, i32
  }
  func.func @transform_5(%arg0: i32) -> (i32, i32) {
    %c0_i32 = arith.constant 0 : i32
    %c0_i32_0 = arith.constant 0 : i32
    return %arg0, %c0_i32 : i32, i32
  }
}

</mosaic_0001>

<llo_original>
// kernel: qnetwork_forward.1
$region0: #{qnetwork_forward.1}
  #allocation0 [shape = 'u32[]', space=smem, size = 0x4, offset = 0x4, fixed_abs, tag = 'smem constant byte address 0x4 - core index']
  #allocation1 [shape = 'u32[144,128]{1,0:T(1,128)}', space=vmem, size = 0x12000, scoped, tag = 'internal scratch']
  %s0 = inlined_call_operand.vmem [shape: f32[8,4], index: 0, kind: input, shape index: {}]
  %s1 = inlined_call_operand.vmem [shape: f32[4,128], index: 1, kind: input, shape index: {}]
  %s2 = inlined_call_operand.vmem [shape: f32[1,128], index: 2, kind: input, shape index: {}]
  %s3 = inlined_call_operand.vmem [shape: f32[128,128], index: 3, kind: input, shape index: {}]
  %s4 = inlined_call_operand.vmem [shape: f32[1,128], index: 4, kind: input, shape index: {}]
  %s5 = inlined_call_operand.vmem [shape: f32[8,128], index: 5, kind: output, shape index: {}]
  %s6 = sld [smem:[#allocation0]]
  $region30: #{qnetwork_forward.1} parent=0
    _
  %s8 = ssub.s32 1, %s6
  %s9 = scalar_select 0, %s8, %s6
  // Predicated region
  $region2: #{qnetwork_forward.1} parent=0 // pred_check
    _
  $region3: #{qnetwork_forward.1} parent=0 // pred_check_branch
    %11 = sbr.rel (0) target = $region5
  $region4: #{qnetwork_forward.1} parent=0 // pred_region
    _
  $region5: #{qnetwork_forward.1} parent=0 // pred_fallthru
    _
  // Predicated region
  $region6: #{qnetwork_forward.1} parent=0 // pred_check
    _
  $region7: #{qnetwork_forward.1} parent=0 // pred_check_branch
    %13 = sbr.rel (0) target = $region9
  $region8: #{qnetwork_forward.1} parent=0 // pred_region
    _
  $region9: #{qnetwork_forward.1} parent=0 // pred_fallthru
    _
  // Predicated region
  $region10: #{qnetwork_forward.1} parent=0 // pred_check
    _
  $region11: #{qnetwork_forward.1} parent=0 // pred_check_branch
    %15 = sbr.rel (0) target = $region13
  $region12: #{qnetwork_forward.1} parent=0 // pred_region
    _
  $region13: #{qnetwork_forward.1} parent=0 // pred_fallthru
    _
  // Predicated region
  $region14: #{qnetwork_forward.1} parent=0 // pred_check
    _
  $region15: #{qnetwork_forward.1} parent=0 // pred_check_branch
    %17 = sbr.rel (0) target = $region17
  $region16: #{qnetwork_forward.1} parent=0 // pred_region
    _
  $region17: #{qnetwork_forward.1} parent=0 // pred_fallthru
    _
  // Predicated region
  $region18: #{qnetwork_forward.1} parent=0 // pred_check
    _
  $region19: #{qnetwork_forward.1} parent=0 // pred_check_branch
    %19 = sbr.rel (0) target = $region21
  $region20: #{qnetwork_forward.1} parent=0 // pred_region
    _
  $region21: #{qnetwork_forward.1} parent=0 // pred_fallthru
    _
  %v20 = vld [vmem:[%s0] sm:$0xff]
  %v21 = vld [vmem:[%s1] sm:$0xf]
  %v22 = vld [vmem:[%s2] sm:$0x1]
  %v24 = vlaneseq
  %v25 = vshrl.u32 %v24, 7
  %v26 = vsub.s32 0, %v25
  %v27 = vrot.slane %v22, %v26
  %30 = vset.pattern.permute.xlu0 0
  %31 = vperm.xlu0 %30, %v20
  %v32 = vpop.permute.xlu0 %31
  %v34 = vlaneseq
  %v35 = vshrl.u32 %v34, 7
  %v36 = vsub.s32 0, %v35
  %v37 = vrot.slane %v21, %v36
  %v38 = vmul.f32 %v32, %v37
  %v39 = vadd.f32 %v27, %v38
  %40 = vset.pattern.permute.xlu0 1
  %41 = vperm.xlu0 %40, %v20
  %v42 = vpop.permute.xlu0 %41
  %v44 = vlaneseq
  %v45 = vshrl.u32 %v44, 7
  %v46 = vsub.s32 1, %v45
  %v47 = vrot.slane %v21, %v46
  %v48 = vmul.f32 %v42, %v47
  %v49 = vadd.f32 %v39, %v48
  %50 = vset.pattern.permute.xlu0 2
  %51 = vperm.xlu0 %50, %v20
  %v52 = vpop.permute.xlu0 %51
  %v54 = vlaneseq
  %v55 = vshrl.u32 %v54, 7
  %v56 = vsub.s32 2, %v55
  %v57 = vrot.slane %v21, %v56
  %v58 = vmul.f32 %v52, %v57
  %v59 = vadd.f32 %v49, %v58
  %60 = vset.pattern.permute.xlu0 3
  %61 = vperm.xlu0 %60, %v20
  %v62 = vpop.permute.xlu0 %61
  %v64 = vlaneseq
  %v65 = vshrl.u32 %v64, 7
  %v66 = vsub.s32 3, %v65
  %v67 = vrot.slane %v21, %v66
  %v68 = vmul.f32 %v62, %v67
  %v69 = vadd.f32 %v59, %v68
  %v70 = vmax.f32 %v69, 0.0
  %v71 = vld [vmem:[%s3] sm:$0xff]
  %v72 = vld [vmem:[%s3 + $0x8] sm:$0xff]
  %v73 = vld [vmem:[%s3 + $0x10] sm:$0xff]
  %v74 = vld [vmem:[%s3 + $0x18] sm:$0xff]
  %v75 = vld [vmem:[%s3 + $0x20] sm:$0xff]
  %v76 = vld [vmem:[%s3 + $0x28] sm:$0xff]
  %v77 = vld [vmem:[%s3 + $0x30] sm:$0xff]
  %v78 = vld [vmem:[%s3 + $0x38] sm:$0xff]
  %v79 = vld [vmem:[%s3 + $0x40] sm:$0xff]
  %v80 = vld [vmem:[%s3 + $0x48] sm:$0xff]
  %v81 = vld [vmem:[%s3 + $0x50] sm:$0xff]
  %v82 = vld [vmem:[%s3 + $0x58] sm:$0xff]
  %v83 = vld [vmem:[%s3 + $0x60] sm:$0xff]
  %v84 = vld [vmem:[%s3 + $0x68] sm:$0xff]
  %v85 = vld [vmem:[%s3 + $0x70] sm:$0xff]
  %v86 = vld [vmem:[%s3 + $0x78] sm:$0xff]
  %v87 = vld [vmem:[%s4] sm:$0x1]
  %v89 = vlaneseq
  %v90 = vshrl.u32 %v89, 7
  %v91 = vsub.s32 0, %v90
  %v92 = vrot.slane %v87, %v91
  %94 = vmatprep.subr.mxu0 0.0
  %95 = vmatpush1.msra.mxu0 %v71
  %96 = vmatprep.subr.mxu0 0.0
  %97 = vmatpush1.msra.mxu0 %v72
  %98 = vmatprep.subr.mxu0 0.0
  %99 = vmatpush1.msra.mxu0 %v73
  %100 = vmatprep.subr.mxu0 0.0
  %101 = vmatpush1.msra.mxu0 %v74
  %102 = vmatprep.subr.mxu0 0.0
  %103 = vmatpush1.msra.mxu0 %v75
  %104 = vmatprep.subr.mxu0 0.0
  %105 = vmatpush1.msra.mxu0 %v76
  %106 = vmatprep.subr.mxu0 0.0
  %107 = vmatpush1.msra.mxu0 %v77
  %108 = vmatprep.subr.mxu0 0.0
  %109 = vmatpush1.msra.mxu0 %v78
  %110 = vmatprep.subr.mxu0 0.0
  %111 = vmatpush1.msra.mxu0 %v79
  %112 = vmatprep.subr.mxu0 0.0
  %113 = vmatpush1.msra.mxu0 %v80
  %114 = vmatprep.subr.mxu0 0.0
  %115 = vmatpush1.msra.mxu0 %v81
  %116 = vmatprep.subr.mxu0 0.0
  %117 = vmatpush1.msra.mxu0 %v82
  %118 = vmatprep.subr.mxu0 0.0
  %119 = vmatpush1.msra.mxu0 %v83
  %120 = vmatprep.subr.mxu0 0.0
  %121 = vmatpush1.msra.mxu0 %v84
  %122 = vmatprep.subr.mxu0 0.0
  %123 = vmatpush1.msra.mxu0 %v85
  %124 = vmatprep.subr.mxu0 0.0
  %125 = vmatpush1.msra.mxu0 %v86
  %126 = vmatprep.subr.mxu0 0.0
  %127 = vmatpush1.msra.mxu0 0.0
  %128 = vmatprep.subr.mxu0 0.0
  %129 = vmatpush1.msra.mxu0 0.0
  %130 = vmatprep.subr.mxu0 0.0
  %131 = vmatpush1.msra.mxu0 0.0
  %132 = vmatprep.subr.mxu0 0.0
  %133 = vmatpush1.msra.mxu0 0.0
  %134 = vmatprep.subr.mxu0 0.0
  %135 = vmatpush1.msra.mxu0 0.0
  %136 = vmatprep.subr.mxu0 0.0
  %137 = vmatpush1.msra.mxu0 0.0
  %138 = vmatprep.subr.mxu0 0.0
  %139 = vmatpush1.msra.mxu0 0.0
  %140 = vmatprep.subr.mxu0 0.0
  %141 = vmatpush1.msra.mxu0 0.0
  %142 = vmatprep.subr.mxu0 0.0
  %143 = vmatpush1.msra.mxu0 0.0
  %144 = vmatprep.subr.mxu0 0.0
  %145 = vmatpush1.msra.mxu0 0.0
  %146 = vmatprep.subr.mxu0 0.0
  %147 = vmatpush1.msra.mxu0 0.0
  %148 = vmatprep.subr.mxu0 0.0
  %149 = vmatpush1.msra.mxu0 0.0
  %150 = vmatprep.subr.mxu0 0.0
  %151 = vmatpush1.msra.mxu0 0.0
  %152 = vmatprep.subr.mxu0 0.0
  %153 = vmatpush1.msra.mxu0 0.0
  %154 = vmatprep.subr.mxu0 0.0
  %155 = vmatpush1.msra.mxu0 0.0
  %156 = vmatprep.subr.mxu0 0.0
  %157 = vmatpush1.msra.mxu0 0.0
  %158 = vmatprep.mubr.f32.mxu0 0.0
  %159 = vmatmul.mubr.f32.gmra.mrb[0].mxu0 %v70
  %v160 = vpop.f32.mrb[0].mxu0
  %v161 = vadd.f32 %v92, %v160
  %v162 = vpop.f32.mrb[0].mxu0
  %163 = vdwg.mxu0
  %164 = vst [vmem:[%s5] sm:$0xff] %v161
  // Predicated region
  $region22: #{qnetwork_forward.1} parent=0 // pred_check
    _
  $region23: #{qnetwork_forward.1} parent=0 // pred_check_branch
    %166 = sbr.rel (0) target = $region25
  $region24: #{qnetwork_forward.1} parent=0 // pred_region
    _
  $region25: #{qnetwork_forward.1} parent=0 // pred_fallthru
    _
  // Predicated region
  $region26: #{qnetwork_forward.1} parent=0 // pred_check
    _
  $region27: #{qnetwork_forward.1} parent=0 // pred_check_branch
    %168 = sbr.rel (0) target = $region29
  $region28: #{qnetwork_forward.1} parent=0 // pred_region
    _
  $region29: #{qnetwork_forward.1} parent=0 // pred_fallthru
    _

</llo_original>
